<compile_context>
chip_gen: v5e
topology: v5e:2x2
jax: 0.10.0
libtpu: 0.0.40
codegen_flags: <defaults>
</compile_context>

<pallas_src>
import jax
import jax.numpy as jnp
from jax.experimental import pallas as pl
from jax.experimental.pallas import tpu as pltpu


def _asc_kernel(x_ref, o_ref):
    # x_ref / o_ref : (1, C, T_HW) tile in VMEM.
    x = x_ref[...]
    # Channel sum accumulated in f32 regardless of input dtype (only the tiny
    # (1, 1, T_HW) normalizer needs f32; the elementwise multiply stays in the
    # input dtype -> halves vreg/VPU traffic for bf16 inputs on v6e/v7x).
    s = jnp.sum(x, axis=1, keepdims=True, dtype=jnp.float32)      # (1, 1, T_HW)
    # Exact reciprocal (approx=False) keeps sum-to-one within ~1e-6; still far
    # cheaper than C per-lane divides (one recip row + one vmul per vreg).
    inv = pl.reciprocal(s, approx=False)
    o_ref[...] = (x * inv.astype(x.dtype)).astype(o_ref.dtype)


def _round_up(n, m):
    return ((n + m - 1) // m) * m


def _choose_tile(hw, c, itemsize, target=2048, vmem_budget=8 << 20):
    """Pick a lane-tile width: multiple of 128, <= target, and small enough
    that double-buffered in+out (4 buffers of C x T) stays well under the
    scoped-VMEM budget even on v7x (64 MiB part / 32 MiB scoped default)."""
    t = min(target, _round_up(hw, 128))
    max_by_vmem = vmem_budget // (4 * c * itemsize)
    max_by_vmem = max(128, (max_by_vmem // 128) * 128)
    t = min(t, max_by_vmem)
    return max(128, (t // 128) * 128)


def asc(x, *, target_tile=2048):
    """x: (B, C, H, W)  ->  (B, C, H, W) with channels summing to one."""
    B, C, H, W = x.shape
    HW = H * W
    x2 = x.reshape(B, C, HW)

    itemsize = jnp.dtype(x.dtype).itemsize
    t_hw = _choose_tile(HW, C, itemsize, target=target_tile)
    hw_pad = _round_up(HW, t_hw)
    if hw_pad != HW:
        # Pad lane axis with 1.0 so padded columns normalize cleanly (to 1/C)
        # with no inf/nan; they are sliced off below.
        x2 = jnp.pad(x2, ((0, 0), (0, 0), (0, hw_pad - HW)), constant_values=1.0)
    n_hw = hw_pad // t_hw

    out = pl.pallas_call(
        _asc_kernel,
        out_shape=jax.ShapeDtypeStruct((B, C, hw_pad), x.dtype),
        grid_spec=pltpu.PrefetchScalarGridSpec(
            num_scalar_prefetch=0,
            grid=(B, n_hw),
            in_specs=[pl.BlockSpec((1, C, t_hw), lambda b, h: (b, 0, h))],
            out_specs=pl.BlockSpec((1, C, t_hw), lambda b, h: (b, 0, h)),
        ),
        compiler_params=pltpu.CompilerParams(
            # Both axes are independent -> shardable across the 2 TCs on v7x.
            dimension_semantics=("parallel", "parallel"),
        ),
        cost_estimate=pl.CostEstimate(
            flops=2 * B * C * hw_pad,
            transcendentals=B * hw_pad,
            bytes_accessed=2 * B * C * hw_pad * itemsize,
        ),
    )(x2)

    if hw_pad != HW:
        out = out[:, :, :HW]
    return out.reshape(B, C, H, W)


if __name__ == "__main__":
    key = jax.random.PRNGKey(0)
    B, C, H, W = 2, 4, 16, 16
    # positive values (abundances) so the channel sum is well-conditioned
    x = jax.random.uniform(key, (B, C, H, W), dtype=jnp.float32,
                           minval=0.1, maxval=1.0)

    y = asc(x)
    y = jax.block_until_ready(y)

    # reference check in plain JAX
    ref = x / jnp.sum(x, axis=1, keepdims=True)
    assert jnp.allclose(y, ref, atol=1e-5, rtol=1e-5), "mismatch vs reference"
    # channels should sum to ~1
    assert jnp.allclose(jnp.sum(y, axis=1), jnp.ones((B, H, W)), atol=1e-5)

    print("KERNEL_OK")
</pallas_src>

<mosaic_0001>
module attributes {stable_mosaic.version = 11 : i64} {
  func.func @_asc_kernel(%arg0: i32, %arg1: i32, %arg2: memref<1x4x256xf32, #tpu.memory_space<vmem>>, %arg3: memref<1x4x256xf32, #tpu.memory_space<vmem>>) attributes {dimension_semantics = [#tpu.dimension_semantics<parallel>, #tpu.dimension_semantics<parallel>], iteration_bounds = array<i64: 2, 1>, scalar_prefetch = 0 : i64, scratch_operands = 0 : i64, tpu.core_type = #tpu.core_type<tc>, window_params = [{transform_indices = @transform_0, window_bounds = array<i64: 1, 4, 256>}, {transform_indices = @transform_1, window_bounds = array<i64: 1, 4, 256>}]} {
    %c0 = arith.constant 0 : index
    %c0_0 = arith.constant 0 : index
    %c0_1 = arith.constant 0 : index
    %0 = vector.load %arg2[%c0, %c0_0, %c0_1] : memref<1x4x256xf32, #tpu.memory_space<vmem>>, vector<1x4x256xf32>
    %cst = arith.constant dense<0.000000e+00> : vector<1x256xf32>
    %1 = vector.multi_reduction <add>, %0, %cst [1] : vector<1x4x256xf32> to vector<1x256xf32>
    %2 = vector.shape_cast %1 : vector<1x256xf32> to vector<1x1x256xf32>
    %3 = tpu.reciprocal %2 : vector<1x1x256xf32> -> vector<1x1x256xf32>
    %4 = vector.broadcast %3 : vector<1x1x256xf32> to vector<1x4x256xf32>
    %5 = arith.mulf %0, %4 : vector<1x4x256xf32>
    %c0_2 = arith.constant 0 : index
    %c0_3 = arith.constant 0 : index
    %c0_4 = arith.constant 0 : index
    %6 = vector.load %arg3[%c0_2, %c0_3, %c0_4] : memref<1x4x256xf32, #tpu.memory_space<vmem>>, vector<1x4x256xf32>
    tpu.vector_store %arg3[%c0_2, %c0_3, %c0_4], %5 {strides = array<i32>} : memref<1x4x256xf32, #tpu.memory_space<vmem>>, vector<1x4x256xf32>,
    return
  }
  func.func @transform_0(%arg0: i32, %arg1: i32) -> (i32, i32, i32) {
    %c0_i32 = arith.constant 0 : i32
    %c0_i32_0 = arith.constant 0 : i32
    return %arg0, %c0_i32, %arg1 : i32, i32, i32
  }
  func.func @transform_1(%arg0: i32, %arg1: i32) -> (i32, i32, i32) {
    %c0_i32 = arith.constant 0 : i32
    %c0_i32_0 = arith.constant 0 : i32
    return %arg0, %c0_i32, %arg1 : i32, i32, i32
  }
}

</mosaic_0001>

<llo_original>
// kernel: tpu_custom_call.1
$region0: #{tpu_custom_call.1}
  #allocation0 [shape = 'u32[]', space=smem, size = 0x4, offset = 0x4, fixed_abs, tag = 'smem constant byte address 0x4 - core index']
  #allocation1 [shape = 'u32[72,128]{1,0:T(1,128)}', space=vmem, size = 0x9000, scoped, tag = 'internal scratch']
  %s0 = inlined_call_operand.hbm [shape: f32[2,4,256], index: 0, kind: input, shape index: {}]
  %s1 = inlined_call_operand.hbm [shape: f32[2,4,256], index: 1, kind: output, shape index: {}]
  %s2 = sld [smem:[#allocation0]]
  $region41: #{tpu_custom_call.1} parent=0
    _
  %s4 = ssub.s32 1, %s2
  %s5 = scalar_select 0, %s4, %s2
  $region1: #{tpu_custom_call.1} parent=0
    #allocation2 [shape = 'u8[8192]{0}', space=vmem, size = 0x2000, scoped, tag = 'input window, operand 0']
    #allocation3 [shape = 's32[2]{0}', space=sflag, size = 0x8, scoped, tag = 'scoped memory for tpu_custom_call.1']
    #allocation4 [shape = 's32[2]{0}', space=sflag, size = 0x8, scoped, tag = 'scoped memory for tpu_custom_call.1']
    #allocation5 [shape = 'u8[8192]{0}', space=vmem, size = 0x2000, scoped, tag = 'output window, operand 0']
    %6 = vsyncpa [#allocation3], 0
    %s7 = scalar_lea.sflag [#allocation3], 1
    %8 = vsyncpa %s7, 0
    %9 = vsyncpa [#allocation4], 0
    %s10 = scalar_lea.sflag [#allocation4], 1
    %11 = vsyncpa %s10, 0
    loop: start=0, step=1, limit=4
    $region2: #{tpu_custom_call.1} parent=1 // loop_pre_header
      _
    $region3: #{tpu_custom_call.1} parent=1 // loop_header
      %s13 = sphi 0, %s17
      %p14 = scmp.ge.s32.totalorder %s13, 4
      %s20 = sphi 0, %s32
      %s21 = sphi 0, %s28
      %s22 = sphi 0, %s20
      %s23 = sphi 0, %s21
      %s24 = sphi 0, %s22
      %s25 = sphi 0, %s23
      %s37 = sphi 0, %s39
      %s40 = sphi 0, %s37
      %s41 = sphi 0, %s40
      %s57 = sphi 0, %s41
      %s65 = sphi 0, %s67
      %s68 = sphi 0, %s65
      %s69 = sphi 0, %s68
      %s85 = sphi 0, %s69
    $region4: #{tpu_custom_call.1} parent=1 // loop_header_branch
      %16 = sbr.rel (%p14) target = $region8
    $region5: #{tpu_custom_call.1} parent=1 // loop_body
      %s18 = ssub.s32 %s13, 1
      %s19 = ssub.s32 %s13, 2
      %s26 = sadd.s32 1, %s21
      %p27 = scmp.ge.s32.totalorder %s26, 1
      %s28 = scalar_select %p27, 0, %s26
      %s29 = sadd.s32 1, %s20
      %s30 = scalar_select %p27, %s29, %s20
      %p31 = scmp.ge.s32.totalorder %s30, 2
      %s32 = scalar_select %p31, 0, %s30
      %s33 = ssub.s32 %s20, %s32
      %s34 = ssub.s32 %s21, %s28
      %s35 = sor.u32 %s33, %s34
      %p36 = scmp.eq.s32.totalorder %s35, 0
      %s38 = sadd.s32 %s37, 1
      %s39 = scalar_select %p36, %s37, %s38
      %p42 = pneg %p36
      %p43 = scmp.eq.s32.totalorder %s13, 1
      %p44 = por %p42, %p43
      %p45 = scmp.ne.s32.totalorder %s37, %s40
      %p46 = scmp.eq.s32.totalorder %s13, 0
      %p47 = por %p45, %p46
      %p48 = scmp.ne.s32.totalorder %s37, %s40
      %p49 = scmp.eq.s32.totalorder %s18, 1
      %p50 = por %p48, %p49
      %p51 = scmp.ne.s32.totalorder %s40, %s41
      %p52 = scmp.eq.s32.totalorder %s18, 0
      %p53 = por %p51, %p52
      %p54 = scmp.ne.s32.totalorder %s40, %s41
      %p55 = scmp.eq.s32.totalorder %s19, 1
      %p56 = por %p54, %p55
      %p58 = scmp.ne.s32.totalorder %s41, %s57
      %p59 = scmp.eq.s32.totalorder %s19, 0
      %p60 = por %p58, %p59
      %s61 = ssub.s32 %s20, %s32
      %s62 = ssub.s32 %s21, %s28
      %s63 = sor.u32 %s61, %s62
      %p64 = scmp.eq.s32.totalorder %s63, 0
      %s66 = sadd.s32 %s65, 1
      %s67 = scalar_select %p64, %s65, %s66
      %p70 = pneg %p64
      %p71 = scmp.eq.s32.totalorder %s13, 1
      %p72 = por %p70, %p71
      %p73 = scmp.ne.s32.totalorder %s65, %s68
      %p74 = scmp.eq.s32.totalorder %s13, 0
      %p75 = por %p73, %p74
      %p76 = scmp.ne.s32.totalorder %s65, %s68
      %p77 = scmp.eq.s32.totalorder %s18, 1
      %p78 = por %p76, %p77
      %p79 = scmp.ne.s32.totalorder %s68, %s69
      %p80 = scmp.eq.s32.totalorder %s18, 0
      %p81 = por %p79, %p80
      %p82 = scmp.ne.s32.totalorder %s68, %s69
      %p83 = scmp.eq.s32.totalorder %s19, 1
      %p84 = por %p82, %p83
      %p86 = scmp.ne.s32.totalorder %s69, %s85
      %p87 = scmp.eq.s32.totalorder %s19, 0
      %p88 = por %p86, %p87
      %p89 = scmp.le.s32.totalorder 1, %s13
      %p90 = scmp.lt.s32.totalorder %s13, 3
      %p91 = pnand %p89, %p90
      %p92 = pneg %p91
      // Predicated region
      $region9: #{tpu_custom_call.1} parent=5 // pred_check
        _
      $region10: #{tpu_custom_call.1} parent=5 // pred_check_branch
        %94 = sbr.rel (%p91) target = $region12
      $region11: #{tpu_custom_call.1} parent=5 // pred_region
        %s95 = ssub.s32 %s13, 1
      $region12: #{tpu_custom_call.1} parent=5 // pred_fallthru
        _
      %p96 = scmp.lt.s32.totalorder %s13, 2
      // Predicated region
      $region13: #{tpu_custom_call.1} parent=5 // pred_check
        %p97 = pneg %p96
      $region14: #{tpu_custom_call.1} parent=5 // pred_check_branch
        %99 = sbr.rel (%p97) target = $region16
      $region15: #{tpu_custom_call.1} parent=5 // pred_region
        // Predicated region
        $region17: #{tpu_custom_call.1} parent=15 // pred_check
          %p100 = pneg %p47
        $region18: #{tpu_custom_call.1} parent=15 // pred_check_branch
          %102 = sbr.rel (%p100) target = $region20
        $region19: #{tpu_custom_call.1} parent=15 // pred_region
          %s103 = sand.u32 %s37, 1
          %s104 = scalar_lea.sflag [#allocation3], %s103
          %s105 = sand.u32 %s37, 1
          %s106 = smul.addr %s105, 8
          %s107 = scalar_lea.vmem [#allocation2], %s106
          %s108 = smul.u32 2, %s21
          %110 = vsyncadd %s104, 0
          %s111 = smul.addr %s20, 2
          %s112 = sadd.s32 %s108, %s111
          %s113 = smul.addr %s112, 4
          %s114 = scalar_lea.hbm %s0, %s113
          %s116 = sshll.u32 %s114, 4
          %s117 = int_to_ptr.hbm [resolvable:$true] %s116
          %s118 = sshll.u32 %s107, 4
          %s119 = int_to_ptr.vmem [resolvable:$true] %s118
          %121 = dma.hbm_to_vmem [thread:$0]  %s117, 128, %s119, %s104
        $region20: #{tpu_custom_call.1} parent=15 // pred_fallthru
          _
      $region16: #{tpu_custom_call.1} parent=5 // pred_fallthru
        _
      %p122 = scmp.le.s32.totalorder 1, %s13
      %p123 = scmp.lt.s32.totalorder %s13, 3
      %p124 = pnand %p122, %p123
      %p125 = pneg %p124
      // Predicated region
      $region21: #{tpu_custom_call.1} parent=5 // pred_check
        _
      $region22: #{tpu_custom_call.1} parent=5 // pred_check_branch
        %127 = sbr.rel (%p124) target = $region24
      $region23: #{tpu_custom_call.1} parent=5 // pred_region
        %s128 = ssub.s32 %s13, 1
        %s129 = sand.u32 %s40, 1
        %s130 = scalar_lea.sflag [#allocation3], %s129
        %s131 = sand.u32 %s40, 1
        %s132 = smul.addr %s131, 8
        %s133 = scalar_lea.vmem [#allocation2], %s132
        // Predicated region
        $region25: #{tpu_custom_call.1} parent=23 // pred_check
          %p134 = pneg %p53
        $region26: #{tpu_custom_call.1} parent=23 // pred_check_branch
          %136 = sbr.rel (%p134) target = $region28
        $region27: #{tpu_custom_call.1} parent=23 // pred_region
          %138 = dma.done %s130, 128
        $region28: #{tpu_custom_call.1} parent=23 // pred_fallthru
          _
        %s139 = sand.u32 %s40, 1
        %s140 = scalar_lea.sflag [#allocation3], %s139
        %s141 = sand.u32 %s40, 1
        %s142 = smul.addr %s141, 8
        %s143 = scalar_lea.vmem [#allocation2], %s142
        %p144 = pneg %p53
        %p145 = pneg %p50
        %p146 = pneg %p81
        %p147 = pneg %p78
        %s148 = sand.u32 %s68, 1
        %s149 = scalar_lea.sflag [#allocation4], %s148
        %s150 = sand.u32 %s68, 1
        %s151 = smul.addr %s150, 8
        %s152 = scalar_lea.vmem [#allocation5], %s151
        %s153 = smul.u32 2, %s23
        %s154 = smul.u32 2, %s23
        %v155 = vld [vmem:[%s133] sm:$0xff]
        %157 = vst [vmem:[#allocation1] ss:$2 sm:$0xff] %v155
        %v158 = vld.sshfl [vmem:[#allocation1] sm:$0xff pattern:$0x75316420]
        %v159 = vld.sshfl [vmem:[#allocation1 + $0x8] sm:$0xff pattern:$0x75316420]
        %vm162 = vcmask 1043456
        %v163 = vsel %vm162, %v158, 0.0
        %v164 = vrot.slane %v163, 4
        %v165 = vadd.f32 %v163, %v164
        %v166 = vrot.slane %v165, 2
        %v167 = vadd.f32 %v165, %v166
        %v168 = vrot.slane %v167, 1
        %v169 = vadd.f32 %v167, %v168
        %v170 = vsel %vm162, %v159, 0.0
        %v171 = vrot.slane %v170, 4
        %v172 = vadd.f32 %v170, %v171
        %v173 = vrot.slane %v172, 2
        %v174 = vadd.f32 %v172, %v173
        %v175 = vrot.slane %v174, 1
        %v176 = vadd.f32 %v174, %v175
        %v177 = vrcp.pop %v169
        %v178 = vmul.f32 %v169, %v177
        %v179 = vsub.f32 1.0, %v178
        %v180 = vmul.f32 %v177, %v179
        %v181 = vadd.f32 %v177, %v180
        %vm182 = vweird.f32 %v169
        %vm183 = vweird.f32 %v177
        %vm184 = vmor %vm182, %vm183
        %v185 = vsel %vm184, %v177, %v181
        %v186 = vand.u32 2147483647, %v169
        %vm187 = vcmp.eq.f32.partialorder %v186, 8.507059e+37
        %v188 = vand.u32 %v169, 2147483648
        %v189 = vor.u32 1.1754944e-38, %v188
        %v190 = vsel %vm187, %v189, %v185
        %v191 = vrcp.pop %v176
        %v192 = vmul.f32 %v176, %v191
        %v193 = vsub.f32 1.0, %v192
        %v194 = vmul.f32 %v191, %v193
        %v195 = vadd.f32 %v191, %v194
        %vm196 = vweird.f32 %v176
        %vm197 = vweird.f32 %v191
        %vm198 = vmor %vm196, %vm197
        %v199 = vsel %vm198, %v191, %v195
        %v200 = vand.u32 2147483647, %v176
        %vm201 = vcmp.eq.f32.partialorder %v200, 8.507059e+37
        %v202 = vand.u32 %v176, 2147483648
        %v203 = vor.u32 1.1754944e-38, %v202
        %v204 = vsel %vm201, %v203, %v199
        %v207 = vrot.slane %v204, 4
        %v208 = vsel %vm162, %v190, %v207
        %v210 = vmul.f32 %v155, %v208
        %211 = vst [vmem:[%s152] sm:$0xff] %v210
        %s212 = sand.u32 %s68, 1
        %s213 = scalar_lea.sflag [#allocation4], %s212
        %s214 = sand.u32 %s68, 1
        %s215 = smul.addr %s214, 8
        %s216 = scalar_lea.vmem [#allocation5], %s215
        // Predicated region
        $region29: #{tpu_custom_call.1} parent=23 // pred_check
          %p217 = pneg %p78
        $region30: #{tpu_custom_call.1} parent=23 // pred_check_branch
          %219 = sbr.rel (%p217) target = $region32
        $region31: #{tpu_custom_call.1} parent=23 // pred_region
          %s220 = smul.u32 2, %s23
          %222 = vsyncadd %s213, 0
          %s223 = smul.addr %s22, 2
          %s224 = sadd.s32 %s220, %s223
          %s225 = smul.addr %s224, 4
          %s226 = scalar_lea.hbm %s1, %s225
          %s228 = sshll.u32 %s216, 4
          %s229 = int_to_ptr.vmem [resolvable:$true] %s228
          %s230 = sshll.u32 %s226, 4
          %s231 = int_to_ptr.hbm [resolvable:$true] %s230
          %233 = dma.vmem_to_hbm [thread:$0]  %s229, 128, %s231, %s213
        $region32: #{tpu_custom_call.1} parent=23 // pred_fallthru
          _
      $region24: #{tpu_custom_call.1} parent=5 // pred_fallthru
        _
      %p234 = scmp.le.s32.totalorder 2, %s13
      // Predicated region
      $region33: #{tpu_custom_call.1} parent=5 // pred_check
        %p235 = pneg %p234
      $region34: #{tpu_custom_call.1} parent=5 // pred_check_branch
        %237 = sbr.rel (%p235) target = $region36
      $region35: #{tpu_custom_call.1} parent=5 // pred_region
        %s238 = ssub.s32 %s13, 2
        // Predicated region
        $region37: #{tpu_custom_call.1} parent=35 // pred_check
          %p239 = pneg %p84
        $region38: #{tpu_custom_call.1} parent=35 // pred_check_branch
          %241 = sbr.rel (%p239) target = $region40
        $region39: #{tpu_custom_call.1} parent=35 // pred_region
          %s242 = sand.u32 %s69, 1
          %s243 = scalar_lea.sflag [#allocation4], %s242
          %s244 = sand.u32 %s69, 1
          %s245 = smul.addr %s244, 8
          %s246 = scalar_lea.vmem [#allocation5], %s245
          %248 = dma.done %s243, 128
        $region40: #{tpu_custom_call.1} parent=35 // pred_fallthru
          _
      $region36: #{tpu_custom_call.1} parent=5 // pred_fallthru
        _
    $region6: #{tpu_custom_call.1} parent=1 // loop_footer
      %s17 = sadd.s32 1, %s13
    $region7: #{tpu_custom_call.1} parent=1 // loop_footer_branch
      %12 = sbr.rel target = $region3
    $region8: #{tpu_custom_call.1} parent=1 // loop_exit
      _
    %249 = vsyncpa [#allocation3], 1
    %s250 = scalar_lea.sflag [#allocation3], 1
    %251 = vsyncpa %s250, 1
    %252 = vsyncpa [#allocation4], 1
    %s253 = scalar_lea.sflag [#allocation4], 1
    %254 = vsyncpa %s253, 1

</llo_original>
